<compile_context>
chip_gen: v7x
topology: tpu7x:2x2x1
jax: 0.10.0
libtpu: 0.0.40
codegen_flags: <defaults>
</compile_context>

<pallas_src>
import jax
import jax.numpy as jnp
from jax.experimental import pallas as pl
from jax.experimental.pallas import tpu as pltpu

SOBEL_X = ((-1.0, 0.0, 1.0), (-2.0, 0.0, 2.0), (-1.0, 0.0, 1.0))
SOBEL_Y = ((-1.0, -2.0, -1.0), (0.0, 0.0, 0.0), (1.0, 2.0, 1.0))   # sobel_x.T
LAPLACE = ((1.0, 2.0, 1.0), (2.0, -12.0, 2.0), (1.0, 2.0, 1.0))


def _dynca_kernel(x_ref, xu_ref, xd_ref, mask_ref, sp_ref,
                  w1t_ref, b1_ref, w2t_ref, b2_ref, o_ref):
    """One (batch, spatial-chunk) tile per grid step.

    x_ref/xu_ref/xd_ref: (1, C, chunk) f32 -- x and its replicate-shifted
    copies along H (rows h-1 / h+1).  chunk is a whole number of image rows,
    flattened onto the lane axis.
    """
    x = x_ref[0]          # (C, chunk)
    xu = xu_ref[0]        # row h-1 (replicate at h=0)
    xd = xd_ref[0]        # row h+1 (replicate at h=H-1)
    m = mask_ref[0]       # (1, chunk) update mask, broadcasts over C
    sp = sp_ref[...]      # (4, chunk): pos_h, pos_w, is_first_col, is_last_col
    pos = sp[0:2]
    first = sp[2:3]
    last = sp[3:4]

    # ---- separable depthwise 3x3 convs, replicate padding -------------------
    # sobel_x = [1,2,1]_H (x) [-1,0,1]_W ; sobel_y = [-1,0,1]_H (x) [1,2,1]_W
    # laplace = [1,2,1]_H (x) [1,2,1]_W - 16 * identity
    bH = xu + 2.0 * x + xd          # [1,2,1] along H
    dH = xd - xu                    # [-1,0,1] along H

    def left(v):                    # neighbour at w-1, replicate at w == 0
        s = jnp.concatenate([v[:, :1], v[:, :-1]], axis=1)
        return jnp.where(first > 0.5, v, s)

    def right(v):                   # neighbour at w+1, replicate at w == W-1
        s = jnp.concatenate([v[:, 1:], v[:, -1:]], axis=1)
        return jnp.where(last > 0.5, v, s)

    bl, br = left(bH), right(bH)
    dl, dr = left(dH), right(dH)
    y1 = br - bl                            # sobel_x
    y2 = dl + 2.0 * dH + dr                 # sobel_y
    y3 = bl + 2.0 * bH + br - 16.0 * x      # laplacian

    # ---- perception stack + 1x1 convs (single K = 4C+2 matmul) --------------
    p = jnp.concatenate([x, y1, y2, y3, pos], axis=0)          # (4C+2, chunk)
    h1 = jnp.dot(w1t_ref[...], p, preferred_element_type=jnp.float32) + b1_ref[...]
    h1 = jnp.maximum(h1, 0.0)                                   # (fc, chunk)
    y = jnp.dot(w2t_ref[...], h1, preferred_element_type=jnp.float32) + b2_ref[...]

    # ---- stochastic residual update -----------------------------------------
    o_ref[0] = x + y * m


def _spatial_constants(H, W):
    """(4, H*W) f32: [CPE pos_h, CPE pos_w, is_first_col, is_last_col]."""
    hi = jnp.repeat(jnp.arange(H), W)
    wi = jnp.tile(jnp.arange(W), H)
    pos_h = (hi.astype(jnp.float32) + 0.5) * (2.0 / H) - 1.0    # == 2*(h/H - 0.5 + 0.5/H)
    pos_w = (wi.astype(jnp.float32) + 0.5) * (2.0 / W) - 1.0
    first = (wi == 0).astype(jnp.float32)
    last = (wi == W - 1).astype(jnp.float32)
    return jnp.stack([pos_h, pos_w, first, last], axis=0)


def _make_update_mask(key, B, HW, update_rate):
    """floor(U[0,1) + update_rate), shape (B, 1, HW). Same distribution as torch."""
    u = jax.random.uniform(key, (B, 1, HW), jnp.float32)
    return jnp.floor(u + jnp.float32(update_rate))


def _pick_chunk(H, W, max_chunk=8192):
    """Largest chunk = (rows)*W that divides H*W, is a multiple of 128 and
    fits max_chunk; falls back to the whole image (single chunk)."""
    HW = H * W
    if HW <= max_chunk:
        return HW
    r_cap = max(1, max_chunk // W)
    for r in range(r_cap, 0, -1):
        if H % r == 0 and (r * W) % 128 == 0:
            return r * W
    return HW


def dynca_init_params(key, c_in, fc_dim):
    """Deterministic synthetic init (shapes match the PyTorch module)."""
    cp = c_in * 4 + 2
    k1, k2, k3 = jax.random.split(key, 3)
    std1 = 0.2 * (2.0 / (cp + fc_dim)) ** 0.5          # xavier_normal_(gain=0.2)
    w1 = jax.random.normal(k1, (cp, fc_dim), jnp.float32) * std1
    b1 = jax.random.uniform(k2, (1, fc_dim), jnp.float32, -1.0, 1.0) / (cp ** 0.5)
    std2 = 0.1 * (2.0 / (fc_dim + c_in)) ** 0.5        # xavier_normal_(gain=0.1)
    w2 = jax.random.normal(k3, (fc_dim, c_in), jnp.float32) * std2
    b2 = jnp.zeros((1, c_in), jnp.float32)             # zeros_ on w2.bias
    return w1, b1, w2, b2


def dynca_forward(x_nchw, params, key, c_out, update_rate=0.5, max_chunk=8192):
    """x_nchw: (B, c_in, H, W) float32. Returns (x_new_nchw, rgb_nchw)."""
    w1, b1, w2, b2 = params
    B, C, H, W = x_nchw.shape
    HW = H * W
    fc_dim = w1.shape[1]
    K = 4 * C + 2
    assert w1.shape[0] == K, "w1 rows must be 4*c_in + 2 (CPE)"

    x_nchw = x_nchw.astype(jnp.float32)
    # Replicate-shifted copies along H: the conv "halo" data.  Computed once in
    # XLA so spatial grid chunks never need cross-chunk reads in the kernel.
    x_up = jnp.concatenate([x_nchw[:, :, :1, :], x_nchw[:, :, :-1, :]], axis=2)
    x_dn = jnp.concatenate([x_nchw[:, :, 1:, :], x_nchw[:, :, -1:, :]], axis=2)

    x_f = x_nchw.reshape(B, C, HW)
    xu_f = x_up.reshape(B, C, HW)
    xd_f = x_dn.reshape(B, C, HW)

    mask = _make_update_mask(key, B, HW, update_rate)          # (B, 1, HW)
    spatial = _spatial_constants(H, W)                         # (4, HW)

    w1t = jnp.asarray(w1, jnp.float32).T                       # (fc, 4C+2)
    b1c = jnp.asarray(b1, jnp.float32).reshape(fc_dim, 1)
    w2t = jnp.asarray(w2, jnp.float32).T                       # (C, fc)
    b2c = jnp.asarray(b2, jnp.float32).reshape(C, 1)

    chunk = _pick_chunk(H, W, max_chunk)
    nchunk = HW // chunk

    # Per-chunk VMEM footprint (streamed blocks double-buffered + temporaries),
    # generous headroom; no artificial 48 MiB clamp against a whole-image set.
    streamed = 4 * chunk * (3 * C + 1 + 4 + C)                 # x, xu, xd, mask, sp, out
    temps = 4 * chunk * (10 * C + K + 2 * fc_dim + 2 * C + 8)
    est = 2 * streamed + temps + (2 << 20)
    vmem_limit = int(min(max(2 * est, 32 * 1024 * 1024), 96 * 1024 * 1024))

    x_new_flat = pl.pallas_call(
        _dynca_kernel,
        out_shape=jax.ShapeDtypeStruct((B, C, HW), jnp.float32),
        grid=(B, nchunk),
        in_specs=[
            pl.BlockSpec((1, C, chunk), lambda b, s: (b, 0, s)),   # x
            pl.BlockSpec((1, C, chunk), lambda b, s: (b, 0, s)),   # x shifted up (h-1)
            pl.BlockSpec((1, C, chunk), lambda b, s: (b, 0, s)),   # x shifted down (h+1)
            pl.BlockSpec((1, 1, chunk), lambda b, s: (b, 0, s)),   # update mask
            pl.BlockSpec((4, chunk), lambda b, s: (0, s)),         # CPE rows + col masks
            pl.BlockSpec((fc_dim, K), lambda b, s: (0, 0)),        # w1^T
            pl.BlockSpec((fc_dim, 1), lambda b, s: (0, 0)),        # b1
            pl.BlockSpec((C, fc_dim), lambda b, s: (0, 0)),        # w2^T
            pl.BlockSpec((C, 1), lambda b, s: (0, 0)),             # b2
        ],
        out_specs=pl.BlockSpec((1, C, chunk), lambda b, s: (b, 0, s)),
        compiler_params=pltpu.CompilerParams(
            dimension_semantics=("parallel", "parallel"),
            vmem_limit_bytes=vmem_limit),
    )(x_f, xu_f, xd_f, mask, spatial, w1t, b1c, w2t, b2c)

    x_new = x_new_flat.reshape(B, C, H, W)                     # NCHW throughout
    rgb = x_new[:, :c_out] * 2.0                               # to_rgb() in the wrapper
    return x_new, rgb


def _reference(x_nchw, params, mask_b1hw):
    """Pure-JAX reference of the full forward (given the same update mask)."""
    w1, b1, w2, b2 = params
    B, C, H, W = x_nchw.shape

    def dconv(z, k):  # depthwise 3x3 cross-correlation, replicate padding
        zp = jnp.pad(z, ((0, 0), (0, 0), (1, 1), (1, 1)), mode="edge")
        k = jnp.asarray(k, jnp.float32)
        out = jnp.zeros_like(z)
        for a in range(3):
            for c in range(3):
                out = out + k[a, c] * zp[:, :, a:a + H, c:c + W]
        return out

    y1 = dconv(x_nchw, SOBEL_X)
    y2 = dconv(x_nchw, SOBEL_Y)
    y3 = dconv(x_nchw, LAPLACE)
    xs = 2.0 * (jnp.arange(H, dtype=jnp.float32) / H - 0.5 + 0.5 / H)
    ys = 2.0 * (jnp.arange(W, dtype=jnp.float32) / W - 0.5 + 0.5 / W)
    pos = jnp.stack([jnp.broadcast_to(xs[:, None], (H, W)),
                     jnp.broadcast_to(ys[None, :], (H, W))], axis=0)
    pos = jnp.broadcast_to(pos[None], (B, 2, H, W))
    percept = jnp.concatenate([x_nchw, y1, y2, y3, pos], axis=1)
    p2 = jnp.transpose(percept, (0, 2, 3, 1)).reshape(B * H * W, -1)
    h1 = jnp.maximum(p2 @ w1 + b1, 0.0)
    y = (h1 @ w2 + b2).reshape(B, H, W, C).transpose(0, 3, 1, 2)
    return x_nchw + y * mask_b1hw


if __name__ == "__main__":
    B, C_IN, C_OUT, H, W, FC_DIM = 2, 4, 3, 16, 16, 32

    root = jax.random.PRNGKey(0)
    k_param, k_x, k_mask = jax.random.split(root, 3)

    params = dynca_init_params(k_param, C_IN, FC_DIM)
    x = jax.random.normal(k_x, (B, C_IN, H, W), jnp.float32)

    # --- single-chunk path (whole 16x16 image in one block) -----------------
    x_new, rgb = dynca_forward(x, params, k_mask, C_OUT, update_rate=0.5)
    x_new = jax.block_until_ready(x_new)
    rgb = jax.block_until_ready(rgb)

    mask = _make_update_mask(k_mask, B, H * W, 0.5).reshape(B, 1, H, W)
    x_ref = _reference(x, params, mask)
    assert x_new.shape == (B, C_IN, H, W)
    assert rgb.shape == (B, C_OUT, H, W)
    err = float(jnp.max(jnp.abs(x_new - x_ref)))
    assert jnp.allclose(x_new, x_ref, rtol=1e-2, atol=1e-2), f"kernel mismatch: {err}"
    assert jnp.allclose(rgb, x_ref[:, :C_OUT] * 2.0, rtol=1e-2, atol=1e-2)
    assert bool(jnp.all(jnp.isfinite(x_new))) and bool(jnp.all(jnp.isfinite(rgb)))

    # --- multi-chunk path (forces spatial grid tiling: 4 chunks of 4 rows) --
    H2, W2 = 16, 128
    x2 = jax.random.normal(jax.random.PRNGKey(7), (B, C_IN, H2, W2), jnp.float32)
    k_mask2 = jax.random.PRNGKey(11)
    x_new2, _ = dynca_forward(x2, params, k_mask2, C_OUT,
                              update_rate=0.5, max_chunk=512)
    x_new2 = jax.block_until_ready(x_new2)
    mask2 = _make_update_mask(k_mask2, B, H2 * W2, 0.5).reshape(B, 1, H2, W2)
    x_ref2 = _reference(x2, params, mask2)
    err2 = float(jnp.max(jnp.abs(x_new2 - x_ref2)))
    assert jnp.allclose(x_new2, x_ref2, rtol=1e-2, atol=1e-2), f"chunked mismatch: {err2}"

    print("KERNEL_OK")
</pallas_src>

<mosaic_0001>
module attributes {stable_mosaic.version = 11 : i64} {
  func.func @_dynca_kernel(%arg0: i32, %arg1: i32, %arg2: memref<1x4x256xf32, #tpu.memory_space<vmem>>, %arg3: memref<1x4x256xf32, #tpu.memory_space<vmem>>, %arg4: memref<1x4x256xf32, #tpu.memory_space<vmem>>, %arg5: memref<1x1x256xf32, #tpu.memory_space<vmem>>, %arg6: memref<4x256xf32, #tpu.memory_space<vmem>>, %arg7: memref<32x18xf32, #tpu.memory_space<vmem>>, %arg8: memref<32x1xf32, #tpu.memory_space<vmem>>, %arg9: memref<4x32xf32, #tpu.memory_space<vmem>>, %arg10: memref<4x1xf32, #tpu.memory_space<vmem>>, %arg11: memref<1x4x256xf32, #tpu.memory_space<vmem>>) attributes {dimension_semantics = [#tpu.dimension_semantics<parallel>, #tpu.dimension_semantics<parallel>], iteration_bounds = array<i64: 2, 1>, scalar_prefetch = 0 : i64, scratch_operands = 0 : i64, tpu.core_type = #tpu.core_type<tc>, window_params = [{transform_indices = @transform_0, window_bounds = array<i64: 1, 4, 256>}, {transform_indices = @transform_1, window_bounds = array<i64: 1, 4, 256>}, {transform_indices = @transform_2, window_bounds = array<i64: 1, 4, 256>}, {transform_indices = @transform_3, window_bounds = array<i64: 1, 1, 256>}, {transform_indices = @transform_4, window_bounds = array<i64: 4, 256>}, {pipeline_mode = #tpu.pipeline_mode<synchronous>, transform_indices = @transform_5, window_bounds = array<i64: 32, 18>}, {pipeline_mode = #tpu.pipeline_mode<synchronous>, transform_indices = @transform_6, window_bounds = array<i64: 32, 1>}, {pipeline_mode = #tpu.pipeline_mode<synchronous>, transform_indices = @transform_7, window_bounds = array<i64: 4, 32>}, {pipeline_mode = #tpu.pipeline_mode<synchronous>, transform_indices = @transform_8, window_bounds = array<i64: 4, 1>}, {transform_indices = @transform_9, window_bounds = array<i64: 1, 4, 256>}]} {
    %c0 = arith.constant 0 : index
    %c0_0 = arith.constant 0 : index
    %c0_1 = arith.constant 0 : index
    %0 = vector.load %arg2[%c0, %c0_0, %c0_1] : memref<1x4x256xf32, #tpu.memory_space<vmem>>, vector<1x4x256xf32>
    %1 = vector.shape_cast %0 : vector<1x4x256xf32> to vector<4x256xf32>
    %c0_2 = arith.constant 0 : index
    %c0_3 = arith.constant 0 : index
    %c0_4 = arith.constant 0 : index
    %2 = vector.load %arg3[%c0_2, %c0_3, %c0_4] : memref<1x4x256xf32, #tpu.memory_space<vmem>>, vector<1x4x256xf32>
    %3 = vector.shape_cast %2 : vector<1x4x256xf32> to vector<4x256xf32>
    %c0_5 = arith.constant 0 : index
    %c0_6 = arith.constant 0 : index
    %c0_7 = arith.constant 0 : index
    %4 = vector.load %arg4[%c0_5, %c0_6, %c0_7] : memref<1x4x256xf32, #tpu.memory_space<vmem>>, vector<1x4x256xf32>
    %5 = vector.shape_cast %4 : vector<1x4x256xf32> to vector<4x256xf32>
    %c0_8 = arith.constant 0 : index
    %c0_9 = arith.constant 0 : index
    %c0_10 = arith.constant 0 : index
    %6 = vector.load %arg5[%c0_8, %c0_9, %c0_10] : memref<1x1x256xf32, #tpu.memory_space<vmem>>, vector<1x1x256xf32>
    %7 = vector.shape_cast %6 : vector<1x1x256xf32> to vector<1x256xf32>
    %c0_11 = arith.constant 0 : index
    %c0_12 = arith.constant 0 : index
    %8 = vector.load %arg6[%c0_11, %c0_12] : memref<4x256xf32, #tpu.memory_space<vmem>>, vector<4x256xf32>
    %9 = vector.extract_strided_slice %8 {offsets = [0, 0], sizes = [2, 256], strides = [1, 1]} : vector<4x256xf32> to vector<2x256xf32>
    %10 = vector.extract_strided_slice %8 {offsets = [2, 0], sizes = [1, 256], strides = [1, 1]} : vector<4x256xf32> to vector<1x256xf32>
    %11 = vector.extract_strided_slice %8 {offsets = [3, 0], sizes = [1, 256], strides = [1, 1]} : vector<4x256xf32> to vector<1x256xf32>
    %cst = arith.constant 2.000000e+00 : f32
    %12 = vector.broadcast %cst : f32 to vector<4x256xf32>
    %13 = arith.mulf %12, %1 : vector<4x256xf32>
    %14 = arith.addf %3, %13 : vector<4x256xf32>
    %15 = arith.addf %14, %5 : vector<4x256xf32>
    %16 = arith.subf %5, %3 : vector<4x256xf32>
    %17 = vector.extract_strided_slice %15 {offsets = [0, 0], sizes = [4, 1], strides = [1, 1]} : vector<4x256xf32> to vector<4x1xf32>
    %18 = vector.extract_strided_slice %15 {offsets = [0, 0], sizes = [4, 255], strides = [1, 1]} : vector<4x256xf32> to vector<4x255xf32>
    %19 = tpu.concatenate %17, %18 in 1 : vector<4x1xf32>, vector<4x255xf32> -> vector<4x256xf32>
    %cst_13 = arith.constant 5.000000e-01 : f32
    %20 = vector.broadcast %cst_13 : f32 to vector<1x256xf32>
    %21 = arith.cmpf ogt, %10, %20 : vector<1x256xf32>
    %22 = vector.shape_cast %21 : vector<1x256xi1> to vector<1x256xi1>
    %23 = vector.broadcast %22 : vector<1x256xi1> to vector<4x256xi1>
    %24 = arith.select %23, %15, %19 : vector<4x256xi1>, vector<4x256xf32>
    %25 = vector.extract_strided_slice %15 {offsets = [0, 1], sizes = [4, 255], strides = [1, 1]} : vector<4x256xf32> to vector<4x255xf32>
    %26 = vector.extract_strided_slice %15 {offsets = [0, 255], sizes = [4, 1], strides = [1, 1]} : vector<4x256xf32> to vector<4x1xf32>
    %27 = tpu.concatenate %25, %26 in 1 : vector<4x255xf32>, vector<4x1xf32> -> vector<4x256xf32>
    %cst_14 = arith.constant 5.000000e-01 : f32
    %28 = vector.broadcast %cst_14 : f32 to vector<1x256xf32>
    %29 = arith.cmpf ogt, %11, %28 : vector<1x256xf32>
    %30 = vector.shape_cast %29 : vector<1x256xi1> to vector<1x256xi1>
    %31 = vector.broadcast %30 : vector<1x256xi1> to vector<4x256xi1>
    %32 = arith.select %31, %15, %27 : vector<4x256xi1>, vector<4x256xf32>
    %33 = vector.extract_strided_slice %16 {offsets = [0, 0], sizes = [4, 1], strides = [1, 1]} : vector<4x256xf32> to vector<4x1xf32>
    %34 = vector.extract_strided_slice %16 {offsets = [0, 0], sizes = [4, 255], strides = [1, 1]} : vector<4x256xf32> to vector<4x255xf32>
    %35 = tpu.concatenate %33, %34 in 1 : vector<4x1xf32>, vector<4x255xf32> -> vector<4x256xf32>
    %cst_15 = arith.constant 5.000000e-01 : f32
    %36 = vector.broadcast %cst_15 : f32 to vector<1x256xf32>
    %37 = arith.cmpf ogt, %10, %36 : vector<1x256xf32>
    %38 = vector.shape_cast %37 : vector<1x256xi1> to vector<1x256xi1>
    %39 = vector.broadcast %38 : vector<1x256xi1> to vector<4x256xi1>
    %40 = arith.select %39, %16, %35 : vector<4x256xi1>, vector<4x256xf32>
    %41 = vector.extract_strided_slice %16 {offsets = [0, 1], sizes = [4, 255], strides = [1, 1]} : vector<4x256xf32> to vector<4x255xf32>
    %42 = vector.extract_strided_slice %16 {offsets = [0, 255], sizes = [4, 1], strides = [1, 1]} : vector<4x256xf32> to vector<4x1xf32>
    %43 = tpu.concatenate %41, %42 in 1 : vector<4x255xf32>, vector<4x1xf32> -> vector<4x256xf32>
    %cst_16 = arith.constant 5.000000e-01 : f32
    %44 = vector.broadcast %cst_16 : f32 to vector<1x256xf32>
    %45 = arith.cmpf ogt, %11, %44 : vector<1x256xf32>
    %46 = vector.shape_cast %45 : vector<1x256xi1> to vector<1x256xi1>
    %47 = vector.broadcast %46 : vector<1x256xi1> to vector<4x256xi1>
    %48 = arith.select %47, %16, %43 : vector<4x256xi1>, vector<4x256xf32>
    %49 = arith.subf %32, %24 : vector<4x256xf32>
    %cst_17 = arith.constant 2.000000e+00 : f32
    %50 = vector.broadcast %cst_17 : f32 to vector<4x256xf32>
    %51 = arith.mulf %50, %16 : vector<4x256xf32>
    %52 = arith.addf %40, %51 : vector<4x256xf32>
    %53 = arith.addf %52, %48 : vector<4x256xf32>
    %cst_18 = arith.constant 2.000000e+00 : f32
    %54 = vector.broadcast %cst_18 : f32 to vector<4x256xf32>
    %55 = arith.mulf %54, %15 : vector<4x256xf32>
    %56 = arith.addf %24, %55 : vector<4x256xf32>
    %57 = arith.addf %56, %32 : vector<4x256xf32>
    %cst_19 = arith.constant 1.600000e+01 : f32
    %58 = vector.broadcast %cst_19 : f32 to vector<4x256xf32>
    %59 = arith.mulf %58, %1 : vector<4x256xf32>
    %60 = arith.subf %57, %59 : vector<4x256xf32>
    %61 = tpu.concatenate %1, %49, %53, %60, %9 in 0 : vector<4x256xf32>, vector<4x256xf32>, vector<4x256xf32>, vector<4x256xf32>, vector<2x256xf32> -> vector<18x256xf32>
    %c0_20 = arith.constant 0 : index
    %c0_21 = arith.constant 0 : index
    %62 = vector.load %arg7[%c0_20, %c0_21] : memref<32x18xf32, #tpu.memory_space<vmem>>, vector<32x18xf32>
    %cst_22 = arith.constant dense<0.000000e+00> : vector<32x256xf32>
    %63 = tpu.matmul %62, %61, %cst_22 {dimension_numbers = #tpu.dot_dimension_numbers<[1], [0], [0], [1], [0, 0, 1, 1], [], []>} : vector<32x18xf32>, vector<18x256xf32>, vector<32x256xf32> -> vector<32x256xf32>
    %c0_23 = arith.constant 0 : index
    %c0_24 = arith.constant 0 : index
    %64 = vector.load %arg8[%c0_23, %c0_24] : memref<32x1xf32, #tpu.memory_space<vmem>>, vector<32x1xf32>
    %65 = vector.broadcast %64 : vector<32x1xf32> to vector<32x256xf32>
    %66 = arith.addf %63, %65 : vector<32x256xf32>
    %cst_25 = arith.constant 0.000000e+00 : f32
    %67 = vector.broadcast %cst_25 : f32 to vector<32x256xf32>
    %68 = arith.maximumf %66, %67 : vector<32x256xf32>
    %c0_26 = arith.constant 0 : index
    %c0_27 = arith.constant 0 : index
    %69 = vector.load %arg9[%c0_26, %c0_27] : memref<4x32xf32, #tpu.memory_space<vmem>>, vector<4x32xf32>
    %cst_28 = arith.constant dense<0.000000e+00> : vector<4x256xf32>
    %70 = tpu.matmul %69, %68, %cst_28 {dimension_numbers = #tpu.dot_dimension_numbers<[1], [0], [0], [1], [0, 0, 1, 1], [], []>} : vector<4x32xf32>, vector<32x256xf32>, vector<4x256xf32> -> vector<4x256xf32>
    %c0_29 = arith.constant 0 : index
    %c0_30 = arith.constant 0 : index
    %71 = vector.load %arg10[%c0_29, %c0_30] : memref<4x1xf32, #tpu.memory_space<vmem>>, vector<4x1xf32>
    %72 = vector.broadcast %71 : vector<4x1xf32> to vector<4x256xf32>
    %73 = arith.addf %70, %72 : vector<4x256xf32>
    %74 = vector.broadcast %7 : vector<1x256xf32> to vector<4x256xf32>
    %75 = arith.mulf %73, %74 : vector<4x256xf32>
    %76 = arith.addf %1, %75 : vector<4x256xf32>
    %c0_31 = arith.constant 0 : index
    %c0_32 = arith.constant 0 : index
    %c0_33 = arith.constant 0 : index
    %77 = vector.load %arg11[%c0_31, %c0_32, %c0_33] : memref<1x4x256xf32, #tpu.memory_space<vmem>>, vector<1x4x256xf32>
    %78 = vector.shape_cast %77 : vector<1x4x256xf32> to vector<4x256xf32>
    %79 = vector.shape_cast %76 : vector<4x256xf32> to vector<1x4x256xf32>
    tpu.vector_store %arg11[%c0_31, %c0_32, %c0_33], %79 {strides = array<i32>} : memref<1x4x256xf32, #tpu.memory_space<vmem>>, vector<1x4x256xf32>,
    return
  }
  func.func @transform_0(%arg0: i32, %arg1: i32) -> (i32, i32, i32) {
    %c0_i32 = arith.constant 0 : i32
    %c0_i32_0 = arith.constant 0 : i32
    return %arg0, %c0_i32, %arg1 : i32, i32, i32
  }
  func.func @transform_1(%arg0: i32, %arg1: i32) -> (i32, i32, i32) {
    %c0_i32 = arith.constant 0 : i32
    %c0_i32_0 = arith.constant 0 : i32
    return %arg0, %c0_i32, %arg1 : i32, i32, i32
  }
  func.func @transform_2(%arg0: i32, %arg1: i32) -> (i32, i32, i32) {
    %c0_i32 = arith.constant 0 : i32
    %c0_i32_0 = arith.constant 0 : i32
    return %arg0, %c0_i32, %arg1 : i32, i32, i32
  }
  func.func @transform_3(%arg0: i32, %arg1: i32) -> (i32, i32, i32) {
    %c0_i32 = arith.constant 0 : i32
    %c0_i32_0 = arith.constant 0 : i32
    return %arg0, %c0_i32, %arg1 : i32, i32, i32
  }
  func.func @transform_4(%arg0: i32, %arg1: i32) -> (i32, i32) {
    %c0_i32 = arith.constant 0 : i32
    %c0_i32_0 = arith.constant 0 : i32
    return %c0_i32, %arg1 : i32, i32
  }
  func.func @transform_5(%arg0: i32, %arg1: i32) -> (i32, i32) {
    %c0_i32 = arith.constant 0 : i32
    %c0_i32_0 = arith.constant 0 : i32
    %c0_i32_1 = arith.constant 0 : i32
    return %c0_i32, %c0_i32_0 : i32, i32
  }
  func.func @transform_6(%arg0: i32, %arg1: i32) -> (i32, i32) {
    %c0_i32 = arith.constant 0 : i32
    %c0_i32_0 = arith.constant 0 : i32
    %c0_i32_1 = arith.constant 0 : i32
    return %c0_i32, %c0_i32_0 : i32, i32
  }
  func.func @transform_7(%arg0: i32, %arg1: i32) -> (i32, i32) {
    %c0_i32 = arith.constant 0 : i32
    %c0_i32_0 = arith.constant 0 : i32
    %c0_i32_1 = arith.constant 0 : i32
    return %c0_i32, %c0_i32_0 : i32, i32
  }
  func.func @transform_8(%arg0: i32, %arg1: i32) -> (i32, i32) {
    %c0_i32 = arith.constant 0 : i32
    %c0_i32_0 = arith.constant 0 : i32
    %c0_i32_1 = arith.constant 0 : i32
    return %c0_i32, %c0_i32_0 : i32, i32
  }
  func.func @transform_9(%arg0: i32, %arg1: i32) -> (i32, i32, i32) {
    %c0_i32 = arith.constant 0 : i32
    %c0_i32_0 = arith.constant 0 : i32
    return %arg0, %c0_i32, %arg1 : i32, i32, i32
  }
}

</mosaic_0001>

<llo_original>
// kernel: tpu_custom_call.1
$region0: #{tpu_custom_call.1}
  #allocation0 [shape = 'u32[]', space=smem, size = 0x4, offset = 0x4, fixed_abs, tag = 'smem constant byte address 0x4 - core index']
  #allocation1 [shape = 'u32[144,128]{1,0:T(1,128)}', space=vmem, size = 0x12000, scoped, tag = 'internal scratch']
  %s0 = inlined_call_operand.vmem [shape: f32[2,4,256], index: 0, kind: input, shape index: {}]
  %s1 = inlined_call_operand.vmem [shape: f32[2,4,256], index: 1, kind: input, shape index: {}]
  %s2 = inlined_call_operand.vmem [shape: f32[2,4,256], index: 2, kind: input, shape index: {}]
  %s3 = inlined_call_operand.vmem [shape: f32[2,1,256], index: 3, kind: input, shape index: {}]
  %s4 = inlined_call_operand.vmem [shape: f32[4,256], index: 4, kind: input, shape index: {}]
  %s5 = inlined_call_operand.vmem [shape: f32[32,18], index: 5, kind: input, shape index: {}]
  %s6 = inlined_call_operand.vmem [shape: f32[32,1], index: 6, kind: input, shape index: {}]
  %s7 = inlined_call_operand.vmem [shape: f32[4,32], index: 7, kind: input, shape index: {}]
  %s8 = inlined_call_operand.vmem [shape: f32[4,1], index: 8, kind: input, shape index: {}]
  %s9 = inlined_call_operand.hbm [shape: f32[2,4,256], index: 9, kind: output, shape index: {}]
  %s10 = sld [smem:[#allocation0]]
  $region69: #{tpu_custom_call.1} parent=0
    _
  %s12 = ssub.s32 1, %s10
  %s13 = scalar_select 0, %s12, %s10
  $region1: #{tpu_custom_call.1} parent=0
    #allocation2 [shape = 'u8[8192]{0}', space=vmem, size = 0x2000, scoped, tag = 'output window, operand 0']
    #allocation3 [shape = 's32[2]{0}', space=sflag, size = 0x8, scoped, tag = 'scoped memory for tpu_custom_call.1']
    %14 = vsyncpa [#allocation3], 0
    %s15 = scalar_lea.sflag [#allocation3], 1
    %16 = vsyncpa %s15, 0
    loop: start=0, step=1, limit=4
    $region2: #{tpu_custom_call.1} parent=1 // loop_pre_header
      _
    $region3: #{tpu_custom_call.1} parent=1 // loop_header
      %s18 = sphi 0, %s22
      %p19 = scmp.ge.s32.totalorder %s18, 4
      %s25 = sphi 0, %s37
      %s26 = sphi 0, %s33
      %s27 = sphi 0, %s25
      %s28 = sphi 0, %s26
      %s29 = sphi 0, %s27
      %s30 = sphi 0, %s28
      %s42 = sphi 0, %s44
      %s45 = sphi 0, %s42
      %s46 = sphi 0, %s45
      %s62 = sphi 0, %s46
      %s70 = sphi 0, %s72
      %s73 = sphi 0, %s70
      %s74 = sphi 0, %s73
      %s90 = sphi 0, %s74
      %s98 = sphi 0, %s100
      %s101 = sphi 0, %s98
      %s102 = sphi 0, %s101
      %s118 = sphi 0, %s102
      %s126 = sphi 0, %s128
      %s129 = sphi 0, %s126
      %s130 = sphi 0, %s129
      %s146 = sphi 0, %s130
      %s152 = sphi 0, %s154
      %s155 = sphi 0, %s152
      %s156 = sphi 0, %s155
      %s172 = sphi 0, %s156
      %s176 = sphi 0, %s176
      %s178 = sphi 0, %s176
      %s179 = sphi 0, %s178
      %s193 = sphi 0, %s179
      %s197 = sphi 0, %s197
      %s199 = sphi 0, %s197
      %s200 = sphi 0, %s199
      %s214 = sphi 0, %s200
      %s218 = sphi 0, %s218
      %s220 = sphi 0, %s218
      %s221 = sphi 0, %s220
      %s235 = sphi 0, %s221
      %s239 = sphi 0, %s239
      %s241 = sphi 0, %s239
      %s242 = sphi 0, %s241
      %s256 = sphi 0, %s242
      %s264 = sphi 0, %s266
      %s267 = sphi 0, %s264
      %s268 = sphi 0, %s267
      %s284 = sphi 0, %s268
    $region4: #{tpu_custom_call.1} parent=1 // loop_header_branch
      %21 = sbr.rel (%p19) target = $region8
    $region5: #{tpu_custom_call.1} parent=1 // loop_body
      %s23 = ssub.s32 %s18, 1
      %s24 = ssub.s32 %s18, 2
      %s31 = sadd.s32 1, %s26
      %p32 = scmp.ge.s32.totalorder %s31, 1
      %s33 = scalar_select %p32, 0, %s31
      %s34 = sadd.s32 1, %s25
      %s35 = scalar_select %p32, %s34, %s25
      %p36 = scmp.ge.s32.totalorder %s35, 2
      %s37 = scalar_select %p36, 0, %s35
      %s38 = ssub.s32 %s25, %s37
      %s39 = ssub.s32 %s26, %s33
      %s40 = sor.u32 %s38, %s39
      %p41 = scmp.eq.s32.totalorder %s40, 0
      %s43 = sadd.s32 %s42, 1
      %s44 = scalar_select %p41, %s42, %s43
      %p47 = pneg %p41
      %p48 = scmp.eq.s32.totalorder %s18, 1
      %p49 = por %p47, %p48
      %p50 = scmp.ne.s32.totalorder %s42, %s45
      %p51 = scmp.eq.s32.totalorder %s18, 0
      %p52 = por %p50, %p51
      %p53 = scmp.ne.s32.totalorder %s42, %s45
      %p54 = scmp.eq.s32.totalorder %s23, 1
      %p55 = por %p53, %p54
      %p56 = scmp.ne.s32.totalorder %s45, %s46
      %p57 = scmp.eq.s32.totalorder %s23, 0
      %p58 = por %p56, %p57
      %p59 = scmp.ne.s32.totalorder %s45, %s46
      %p60 = scmp.eq.s32.totalorder %s24, 1
      %p61 = por %p59, %p60
      %p63 = scmp.ne.s32.totalorder %s46, %s62
      %p64 = scmp.eq.s32.totalorder %s24, 0
      %p65 = por %p63, %p64
      %s66 = ssub.s32 %s25, %s37
      %s67 = ssub.s32 %s26, %s33
      %s68 = sor.u32 %s66, %s67
      %p69 = scmp.eq.s32.totalorder %s68, 0
      %s71 = sadd.s32 %s70, 1
      %s72 = scalar_select %p69, %s70, %s71
      %p75 = pneg %p69
      %p76 = scmp.eq.s32.totalorder %s18, 1
      %p77 = por %p75, %p76
      %p78 = scmp.ne.s32.totalorder %s70, %s73
      %p79 = scmp.eq.s32.totalorder %s18, 0
      %p80 = por %p78, %p79
      %p81 = scmp.ne.s32.totalorder %s70, %s73
      %p82 = scmp.eq.s32.totalorder %s23, 1
      %p83 = por %p81, %p82
      %p84 = scmp.ne.s32.totalorder %s73, %s74
      %p85 = scmp.eq.s32.totalorder %s23, 0
      %p86 = por %p84, %p85
      %p87 = scmp.ne.s32.totalorder %s73, %s74
      %p88 = scmp.eq.s32.totalorder %s24, 1
      %p89 = por %p87, %p88
      %p91 = scmp.ne.s32.totalorder %s74, %s90
      %p92 = scmp.eq.s32.totalorder %s24, 0
      %p93 = por %p91, %p92
      %s94 = ssub.s32 %s25, %s37
      %s95 = ssub.s32 %s26, %s33
      %s96 = sor.u32 %s94, %s95
      %p97 = scmp.eq.s32.totalorder %s96, 0
      %s99 = sadd.s32 %s98, 1
      %s100 = scalar_select %p97, %s98, %s99
      %p103 = pneg %p97
      %p104 = scmp.eq.s32.totalorder %s18, 1
      %p105 = por %p103, %p104
      %p106 = scmp.ne.s32.totalorder %s98, %s101
      %p107 = scmp.eq.s32.totalorder %s18, 0
      %p108 = por %p106, %p107
      %p109 = scmp.ne.s32.totalorder %s98, %s101
      %p110 = scmp.eq.s32.totalorder %s23, 1
      %p111 = por %p109, %p110
      %p112 = scmp.ne.s32.totalorder %s101, %s102
      %p113 = scmp.eq.s32.totalorder %s23, 0
      %p114 = por %p112, %p113
      %p115 = scmp.ne.s32.totalorder %s101, %s102
      %p116 = scmp.eq.s32.totalorder %s24, 1
      %p117 = por %p115, %p116
      %p119 = scmp.ne.s32.totalorder %s102, %s118
      %p120 = scmp.eq.s32.totalorder %s24, 0
      %p121 = por %p119, %p120
      %s122 = ssub.s32 %s25, %s37
      %s123 = ssub.s32 %s26, %s33
      %s124 = sor.u32 %s122, %s123
      %p125 = scmp.eq.s32.totalorder %s124, 0
      %s127 = sadd.s32 %s126, 1
      %s128 = scalar_select %p125, %s126, %s127
      %p131 = pneg %p125
      %p132 = scmp.eq.s32.totalorder %s18, 1
      %p133 = por %p131, %p132
      %p134 = scmp.ne.s32.totalorder %s126, %s129
      %p135 = scmp.eq.s32.totalorder %s18, 0
      %p136 = por %p134, %p135
      %p137 = scmp.ne.s32.totalorder %s126, %s129
      %p138 = scmp.eq.s32.totalorder %s23, 1
      %p139 = por %p137, %p138
      %p140 = scmp.ne.s32.totalorder %s129, %s130
      %p141 = scmp.eq.s32.totalorder %s23, 0
      %p142 = por %p140, %p141
      %p143 = scmp.ne.s32.totalorder %s129, %s130
      %p144 = scmp.eq.s32.totalorder %s24, 1
      %p145 = por %p143, %p144
      %p147 = scmp.ne.s32.totalorder %s130, %s146
      %p148 = scmp.eq.s32.totalorder %s24, 0
      %p149 = por %p147, %p148
      %s150 = ssub.s32 %s26, %s33
      %p151 = scmp.eq.s32.totalorder %s150, 0
      %s153 = sadd.s32 %s152, 1
      %s154 = scalar_select %p151, %s152, %s153
      %p157 = pneg %p151
      %p158 = scmp.eq.s32.totalorder %s18, 1
      %p159 = por %p157, %p158
      %p160 = scmp.ne.s32.totalorder %s152, %s155
      %p161 = scmp.eq.s32.totalorder %s18, 0
      %p162 = por %p160, %p161
      %p163 = scmp.ne.s32.totalorder %s152, %s155
      %p164 = scmp.eq.s32.totalorder %s23, 1
      %p165 = por %p163, %p164
      %p166 = scmp.ne.s32.totalorder %s155, %s156
      %p167 = scmp.eq.s32.totalorder %s23, 0
      %p168 = por %p166, %p167
      %p169 = scmp.ne.s32.totalorder %s155, %s156
      %p170 = scmp.eq.s32.totalorder %s24, 1
      %p171 = por %p169, %p170
      %p173 = scmp.ne.s32.totalorder %s156, %s172
      %p174 = scmp.eq.s32.totalorder %s24, 0
      %p175 = por %p173, %p174
      %s177 = sadd.s32 %s176, 1
      %p180 = scmp.eq.s32.totalorder %s18, 1
      %p181 = scmp.ne.s32.totalorder %s176, %s178
      %p182 = scmp.eq.s32.totalorder %s18, 0
      %p183 = por %p181, %p182
      %p184 = scmp.ne.s32.totalorder %s176, %s178
      %p185 = scmp.eq.s32.totalorder %s23, 1
      %p186 = por %p184, %p185
      %p187 = scmp.ne.s32.totalorder %s178, %s179
      %p188 = scmp.eq.s32.totalorder %s23, 0
      %p189 = por %p187, %p188
      %p190 = scmp.ne.s32.totalorder %s178, %s179
      %p191 = scmp.eq.s32.totalorder %s24, 1
      %p192 = por %p190, %p191
      %p194 = scmp.ne.s32.totalorder %s179, %s193
      %p195 = scmp.eq.s32.totalorder %s24, 0
      %p196 = por %p194, %p195
      %s198 = sadd.s32 %s197, 1
      %p201 = scmp.eq.s32.totalorder %s18, 1
      %p202 = scmp.ne.s32.totalorder %s197, %s199
      %p203 = scmp.eq.s32.totalorder %s18, 0
      %p204 = por %p202, %p203
      %p205 = scmp.ne.s32.totalorder %s197, %s199
      %p206 = scmp.eq.s32.totalorder %s23, 1
      %p207 = por %p205, %p206
      %p208 = scmp.ne.s32.totalorder %s199, %s200
      %p209 = scmp.eq.s32.totalorder %s23, 0
      %p210 = por %p208, %p209
      %p211 = scmp.ne.s32.totalorder %s199, %s200
      %p212 = scmp.eq.s32.totalorder %s24, 1
      %p213 = por %p211, %p212
      %p215 = scmp.ne.s32.totalorder %s200, %s214
      %p216 = scmp.eq.s32.totalorder %s24, 0
      %p217 = por %p215, %p216
      %s219 = sadd.s32 %s218, 1
      %p222 = scmp.eq.s32.totalorder %s18, 1
      %p223 = scmp.ne.s32.totalorder %s218, %s220
      %p224 = scmp.eq.s32.totalorder %s18, 0
      %p225 = por %p223, %p224
      %p226 = scmp.ne.s32.totalorder %s218, %s220
      %p227 = scmp.eq.s32.totalorder %s23, 1
      %p228 = por %p226, %p227
      %p229 = scmp.ne.s32.totalorder %s220, %s221
      %p230 = scmp.eq.s32.totalorder %s23, 0
      %p231 = por %p229, %p230
      %p232 = scmp.ne.s32.totalorder %s220, %s221
      %p233 = scmp.eq.s32.totalorder %s24, 1
      %p234 = por %p232, %p233
      %p236 = scmp.ne.s32.totalorder %s221, %s235
      %p237 = scmp.eq.s32.totalorder %s24, 0
      %p238 = por %p236, %p237
      %s240 = sadd.s32 %s239, 1
      %p243 = scmp.eq.s32.totalorder %s18, 1
      %p244 = scmp.ne.s32.totalorder %s239, %s241
      %p245 = scmp.eq.s32.totalorder %s18, 0
      %p246 = por %p244, %p245
      %p247 = scmp.ne.s32.totalorder %s239, %s241
      %p248 = scmp.eq.s32.totalorder %s23, 1
      %p249 = por %p247, %p248
      %p250 = scmp.ne.s32.totalorder %s241, %s242
      %p251 = scmp.eq.s32.totalorder %s23, 0
      %p252 = por %p250, %p251
      %p253 = scmp.ne.s32.totalorder %s241, %s242
      %p254 = scmp.eq.s32.totalorder %s24, 1
      %p255 = por %p253, %p254
      %p257 = scmp.ne.s32.totalorder %s242, %s256
      %p258 = scmp.eq.s32.totalorder %s24, 0
      %p259 = por %p257, %p258
      %s260 = ssub.s32 %s25, %s37
      %s261 = ssub.s32 %s26, %s33
      %s262 = sor.u32 %s260, %s261
      %p263 = scmp.eq.s32.totalorder %s262, 0
      %s265 = sadd.s32 %s264, 1
      %s266 = scalar_select %p263, %s264, %s265
      %p269 = pneg %p263
      %p270 = scmp.eq.s32.totalorder %s18, 1
      %p271 = por %p269, %p270
      %p272 = scmp.ne.s32.totalorder %s264, %s267
      %p273 = scmp.eq.s32.totalorder %s18, 0
      %p274 = por %p272, %p273
      %p275 = scmp.ne.s32.totalorder %s264, %s267
      %p276 = scmp.eq.s32.totalorder %s23, 1
      %p277 = por %p275, %p276
      %p278 = scmp.ne.s32.totalorder %s267, %s268
      %p279 = scmp.eq.s32.totalorder %s23, 0
      %p280 = por %p278, %p279
      %p281 = scmp.ne.s32.totalorder %s267, %s268
      %p282 = scmp.eq.s32.totalorder %s24, 1
      %p283 = por %p281, %p282
      %p285 = scmp.ne.s32.totalorder %s268, %s284
      %p286 = scmp.eq.s32.totalorder %s24, 0
      %p287 = por %p285, %p286
      %p288 = scmp.le.s32.totalorder 1, %s18
      %p289 = scmp.lt.s32.totalorder %s18, 3
      %p290 = pnand %p288, %p289
      %p291 = pneg %p290
      // Predicated region
      $region9: #{tpu_custom_call.1} parent=5 // pred_check
        _
      $region10: #{tpu_custom_call.1} parent=5 // pred_check_branch
        %293 = sbr.rel (%p290) target = $region12
      $region11: #{tpu_custom_call.1} parent=5 // pred_region
        %s294 = ssub.s32 %s18, 1
        // Predicated region
        $region13: #{tpu_custom_call.1} parent=11 // pred_check
          %p295 = pneg %p168
        $region14: #{tpu_custom_call.1} parent=11 // pred_check_branch
          %297 = sbr.rel (%p295) target = $region16
        $region15: #{tpu_custom_call.1} parent=11 // pred_region
          %s298 = smul.u32 2, %s28
          %p299 = scmp.lt.s32.totalorder %s298, 1
          %s300 = scalar_select %p299, %s298, 1
          %s301 = smul.addr %s300, 4
          %s302 = scalar_lea.vmem %s4, %s301
          %s303 = smul.u32 2, %s28
        $region16: #{tpu_custom_call.1} parent=11 // pred_fallthru
          _
        // Predicated region
        $region17: #{tpu_custom_call.1} parent=11 // pred_check
          %p304 = pneg %p189
        $region18: #{tpu_custom_call.1} parent=11 // pred_check_branch
          %306 = sbr.rel (%p304) target = $region20
        $region19: #{tpu_custom_call.1} parent=11 // pred_region
          _
        $region20: #{tpu_custom_call.1} parent=11 // pred_fallthru
          _
        // Predicated region
        $region21: #{tpu_custom_call.1} parent=11 // pred_check
          %p307 = pneg %p210
        $region22: #{tpu_custom_call.1} parent=11 // pred_check_branch
          %309 = sbr.rel (%p307) target = $region24
        $region23: #{tpu_custom_call.1} parent=11 // pred_region
          _
        $region24: #{tpu_custom_call.1} parent=11 // pred_fallthru
          _
        // Predicated region
        $region25: #{tpu_custom_call.1} parent=11 // pred_check
          %p310 = pneg %p231
        $region26: #{tpu_custom_call.1} parent=11 // pred_check_branch
          %312 = sbr.rel (%p310) target = $region28
        $region27: #{tpu_custom_call.1} parent=11 // pred_region
          _
        $region28: #{tpu_custom_call.1} parent=11 // pred_fallthru
          _
        // Predicated region
        $region29: #{tpu_custom_call.1} parent=11 // pred_check
          %p313 = pneg %p252
        $region30: #{tpu_custom_call.1} parent=11 // pred_check_branch
          %315 = sbr.rel (%p313) target = $region32
        $region31: #{tpu_custom_call.1} parent=11 // pred_region
          _
        $region32: #{tpu_custom_call.1} parent=11 // pred_fallthru
          _
      $region12: #{tpu_custom_call.1} parent=5 // pred_fallthru
        _
      %p316 = scmp.lt.s32.totalorder %s18, 2
      // Predicated region
      $region33: #{tpu_custom_call.1} parent=5 // pred_check
        %p317 = pneg %p316
      $region34: #{tpu_custom_call.1} parent=5 // pred_check_branch
        %319 = sbr.rel (%p317) target = $region36
      $region35: #{tpu_custom_call.1} parent=5 // pred_region
        // Predicated region
        $region37: #{tpu_custom_call.1} parent=35 // pred_check
          %p320 = pneg %p52
        $region38: #{tpu_custom_call.1} parent=35 // pred_check_branch
          %322 = sbr.rel (%p320) target = $region40
        $region39: #{tpu_custom_call.1} parent=35 // pred_region
          %s323 = smul.u32 2, %s26
          %p324 = scmp.lt.s32.totalorder %s25, 1
          %s325 = scalar_select %p324, %s25, 1
          %p326 = scmp.lt.s32.totalorder %s323, 1
          %s327 = scalar_select %p326, %s323, 1
          %s328 = smul.addr %s325, 2
          %s329 = sadd.s32 %s327, %s328
          %s330 = smul.addr %s329, 4
          %s331 = scalar_lea.vmem %s0, %s330
          %s332 = smul.u32 2, %s26
        $region40: #{tpu_custom_call.1} parent=35 // pred_fallthru
          _
        // Predicated region
        $region41: #{tpu_custom_call.1} parent=35 // pred_check
          %p333 = pneg %p80
        $region42: #{tpu_custom_call.1} parent=35 // pred_check_branch
          %335 = sbr.rel (%p333) target = $region44
        $region43: #{tpu_custom_call.1} parent=35 // pred_region
          %s336 = smul.u32 2, %s26
          %p337 = scmp.lt.s32.totalorder %s25, 1
          %s338 = scalar_select %p337, %s25, 1
          %p339 = scmp.lt.s32.totalorder %s336, 1
          %s340 = scalar_select %p339, %s336, 1
          %s341 = smul.addr %s338, 2
          %s342 = sadd.s32 %s340, %s341
          %s343 = smul.addr %s342, 4
          %s344 = scalar_lea.vmem %s1, %s343
          %s345 = smul.u32 2, %s26
        $region44: #{tpu_custom_call.1} parent=35 // pred_fallthru
          _
        // Predicated region
        $region45: #{tpu_custom_call.1} parent=35 // pred_check
          %p346 = pneg %p108
        $region46: #{tpu_custom_call.1} parent=35 // pred_check_branch
          %348 = sbr.rel (%p346) target = $region48
        $region47: #{tpu_custom_call.1} parent=35 // pred_region
          %s349 = smul.u32 2, %s26
          %p350 = scmp.lt.s32.totalorder %s25, 1
          %s351 = scalar_select %p350, %s25, 1
          %p352 = scmp.lt.s32.totalorder %s349, 1
          %s353 = scalar_select %p352, %s349, 1
          %s354 = smul.addr %s351, 2
          %s355 = sadd.s32 %s353, %s354
          %s356 = smul.addr %s355, 4
          %s357 = scalar_lea.vmem %s2, %s356
          %s358 = smul.u32 2, %s26
        $region48: #{tpu_custom_call.1} parent=35 // pred_fallthru
          _
        // Predicated region
        $region49: #{tpu_custom_call.1} parent=35 // pred_check
          %p359 = pneg %p136
        $region50: #{tpu_custom_call.1} parent=35 // pred_check_branch
          %361 = sbr.rel (%p359) target = $region52
        $region51: #{tpu_custom_call.1} parent=35 // pred_region
          %s362 = smul.u32 2, %s26
          %p363 = scmp.lt.s32.totalorder %s25, 1
          %s364 = scalar_select %p363, %s25, 1
          %p365 = scmp.lt.s32.totalorder %s362, 1
          %s366 = scalar_select %p365, %s362, 1
          %s367 = smul.addr %s364, 2
          %s368 = sadd.s32 %s366, %s367
          %s369 = scalar_lea.vmem %s3, %s368
          %s370 = smul.u32 2, %s26
        $region52: #{tpu_custom_call.1} parent=35 // pred_fallthru
          _
      $region36: #{tpu_custom_call.1} parent=5 // pred_fallthru
        _
      %p371 = scmp.le.s32.totalorder 1, %s18
      %p372 = scmp.lt.s32.totalorder %s18, 3
      %p373 = pnand %p371, %p372
      %p374 = pneg %p373
      // Predicated region
      $region53: #{tpu_custom_call.1} parent=5 // pred_check
        _
      $region54: #{tpu_custom_call.1} parent=5 // pred_check_branch
        %376 = sbr.rel (%p373) target = $region56
      $region55: #{tpu_custom_call.1} parent=5 // pred_region
        %s377 = ssub.s32 %s18, 1
        %s378 = smul.u32 2, %s28
        %p379 = scmp.lt.s32.totalorder %s27, 1
        %s380 = scalar_select %p379, %s27, 1
        %p381 = scmp.lt.s32.totalorder %s378, 1
        %s382 = scalar_select %p381, %s378, 1
        %s383 = smul.addr %s380, 2
        %s384 = sadd.s32 %s382, %s383
        %s385 = smul.addr %s384, 4
        %s386 = scalar_lea.vmem %s0, %s385
        %p387 = pneg %p58
        %p388 = pneg %p55
        %s389 = smul.u32 2, %s28
        %p390 = scmp.lt.s32.totalorder %s27, 1
        %s391 = scalar_select %p390, %s27, 1
        %p392 = scmp.lt.s32.totalorder %s389, 1
        %s393 = scalar_select %p392, %s389, 1
        %s394 = smul.addr %s391, 2
        %s395 = sadd.s32 %s393, %s394
        %s396 = smul.addr %s395, 4
        %s397 = scalar_lea.vmem %s1, %s396
        %p398 = pneg %p86
        %p399 = pneg %p83
        %s400 = smul.u32 2, %s28
        %p401 = scmp.lt.s32.totalorder %s27, 1
        %s402 = scalar_select %p401, %s27, 1
        %p403 = scmp.lt.s32.totalorder %s400, 1
        %s404 = scalar_select %p403, %s400, 1
        %s405 = smul.addr %s402, 2
        %s406 = sadd.s32 %s404, %s405
        %s407 = smul.addr %s406, 4
        %s408 = scalar_lea.vmem %s2, %s407
        %p409 = pneg %p114
        %p410 = pneg %p111
        %s411 = smul.u32 2, %s28
        %p412 = scmp.lt.s32.totalorder %s27, 1
        %s413 = scalar_select %p412, %s27, 1
        %p414 = scmp.lt.s32.totalorder %s411, 1
        %s415 = scalar_select %p414, %s411, 1
        %s416 = smul.addr %s413, 2
        %s417 = sadd.s32 %s415, %s416
        %s418 = scalar_lea.vmem %s3, %s417
        %p419 = pneg %p142
        %p420 = pneg %p139
        %s421 = smul.u32 2, %s28
        %p422 = scmp.lt.s32.totalorder %s421, 1
        %s423 = scalar_select %p422, %s421, 1
        %s424 = smul.addr %s423, 4
        %s425 = scalar_lea.vmem %s4, %s424
        %p426 = pneg %p168
        %p427 = pneg %p165
        %p428 = pneg %p189
        %p429 = pneg %p186
        %p430 = pneg %p210
        %p431 = pneg %p207
        %p432 = pneg %p231
        %p433 = pneg %p228
        %p434 = pneg %p252
        %p435 = pneg %p249
        %p436 = pneg %p280
        %p437 = pneg %p277
        %s438 = sand.u32 %s267, 1
        %s439 = scalar_lea.sflag [#allocation3], %s438
        %s440 = sand.u32 %s267, 1
        %s441 = smul.addr %s440, 8
        %s442 = scalar_lea.vmem [#allocation2], %s441
        %s443 = smul.u32 2, %s28
        %p444 = scmp.lt.s32.totalorder %s27, 1
        %s445 = scalar_select %p444, %s27, 1
        %p446 = scmp.lt.s32.totalorder %s443, 1
        %s447 = scalar_select %p446, %s443, 1
        %s448 = smul.addr %s445, 2
        %s449 = sadd.s32 %s447, %s448
        %s450 = smul.addr %s449, 4
        %s451 = scalar_lea.vmem %s0, %s450
        %s452 = smul.u32 2, %s28
        %s453 = smul.u32 2, %s28
        %p454 = scmp.lt.s32.totalorder %s27, 1
        %s455 = scalar_select %p454, %s27, 1
        %p456 = scmp.lt.s32.totalorder %s453, 1
        %s457 = scalar_select %p456, %s453, 1
        %s458 = smul.addr %s455, 2
        %s459 = sadd.s32 %s457, %s458
        %s460 = smul.addr %s459, 4
        %s461 = scalar_lea.vmem %s1, %s460
        %s462 = smul.u32 2, %s28
        %s463 = smul.u32 2, %s28
        %p464 = scmp.lt.s32.totalorder %s27, 1
        %s465 = scalar_select %p464, %s27, 1
        %p466 = scmp.lt.s32.totalorder %s463, 1
        %s467 = scalar_select %p466, %s463, 1
        %s468 = smul.addr %s465, 2
        %s469 = sadd.s32 %s467, %s468
        %s470 = smul.addr %s469, 4
        %s471 = scalar_lea.vmem %s2, %s470
        %s472 = smul.u32 2, %s28
        %s473 = smul.u32 2, %s28
        %p474 = scmp.lt.s32.totalorder %s27, 1
        %s475 = scalar_select %p474, %s27, 1
        %p476 = scmp.lt.s32.totalorder %s473, 1
        %s477 = scalar_select %p476, %s473, 1
        %s478 = smul.addr %s475, 2
        %s479 = sadd.s32 %s477, %s478
        %s480 = scalar_lea.vmem %s3, %s479
        %s481 = smul.u32 2, %s28
        %s482 = smul.u32 2, %s28
        %p483 = scmp.lt.s32.totalorder %s482, 1
        %s484 = scalar_select %p483, %s482, 1
        %s485 = smul.addr %s484, 4
        %s486 = scalar_lea.vmem %s4, %s485
        %s487 = smul.u32 2, %s28
        %s488 = smul.u32 2, %s28
        %v489 = vld [vmem:[%s451] sm:$0xff]
        %v490 = vld [vmem:[%s461] sm:$0xff]
        %v491 = vld [vmem:[%s471] sm:$0xff]
        %v492 = vld [vmem:[%s480] sm:$0x3]
        %v493 = vld [vmem:[%s486] sm:$0xff]
        %v494 = vmul.f32 %v489, 2.0
        %v495 = vadd.f32 %v490, %v494
        %v496 = vadd.f32 %v495, %v491
        %v497 = vsub.f32 %v491, %v490
        %v499 = vcombine.high %v496, %v496
        %500 = vrot.lane.b32.xlu0 %v496, 1
        %v501 = vpop.permute.xlu0 %500
        %502 = vrot.lane.b32.xlu0 %v499, 1
        %v503 = vpop.permute.xlu0 %502
        %vm504 = vcmask 7168
        %v505 = vsel %vm504, %v501, %v503
        %v508 = vsel %vm504, %v496, %v501
        %vm509 = vcmp.gt.f32.partialorder %v493, 0.5
        %v510 = vsel %vm509, 1, 0
        %v511 = vlaneseq
        %v512 = vshrl.u32 %v511, 7
        %v513 = vsub.s32 2, %v512
        %v514 = vrot.slane %v510, %v513
        %v515 = vlaneseq
        %v516 = vshrl.u32 %v515, 7
        %v517 = vsub.s32 6, %v516
        %v518 = vrot.slane %v510, %v517
        %v519 = vlaneseq
        %v520 = vshrl.u32 %v519, 7
        %v521 = vsub.s32 2, %v520
        %v522 = vrot.slane %v514, %v521
        %v523 = vlaneseq
        %v524 = vshrl.u32 %v523, 7
        %v525 = vsub.s32 2, %v524
        %v526 = vrot.slane %v518, %v525
        %vm527 = vcmp.eq.s32.totalorder %v522, 1
        %vm528 = vcmp.eq.s32.totalorder %v526, 1
        %v530 = vsel %vm527, %v496, %v508
        %v531 = vsel %vm528, %v499, %v505
        %532 = vrot.lane.b32.xlu0 %v496, 127
        %v533 = vpop.permute.xlu0 %532
        %534 = vrot.lane.b32.xlu0 %v499, 127
        %v535 = vpop.permute.xlu0 %534
        %vm536 = vcmask 1039360
        %v537 = vsel %vm536, %v533, %v535
        %v540 = vsel %vm536, %v535, %v499
        %v541 = vlaneseq
        %v542 = vshrl.u32 %v541, 7
        %v543 = vsub.s32 3, %v542
        %v544 = vrot.slane %v510, %v543
        %v545 = vlaneseq
        %v546 = vshrl.u32 %v545, 7
        %v547 = vsub.s32 7, %v546
        %v548 = vrot.slane %v510, %v547
        %v549 = vlaneseq
        %v550 = vshrl.u32 %v549, 7
        %v551 = vsub.s32 3, %v550
        %v552 = vrot.slane %v544, %v551
        %v553 = vlaneseq
        %v554 = vshrl.u32 %v553, 7
        %v555 = vsub.s32 3, %v554
        %v556 = vrot.slane %v548, %v555
        %vm557 = vcmp.eq.s32.totalorder %v552, 1
        %vm558 = vcmp.eq.s32.totalorder %v556, 1
        %v559 = vsel %vm557, %v496, %v537
        %v560 = vsel %vm558, %v499, %v540
        %v562 = vcombine.high %v497, %v497
        %563 = vrot.lane.b32.xlu0 %v497, 1
        %v564 = vpop.permute.xlu0 %563
        %565 = vrot.lane.b32.xlu0 %v562, 1
        %v566 = vpop.permute.xlu0 %565
        %v567 = vsel %vm504, %v564, %v566
        %v570 = vsel %vm504, %v497, %v564
        %v572 = vsel %vm527, %v497, %v570
        %v573 = vsel %vm528, %v562, %v567
        %574 = vrot.lane.b32.xlu0 %v497, 127
        %v575 = vpop.permute.xlu0 %574
        %576 = vrot.lane.b32.xlu0 %v562, 127
        %v577 = vpop.permute.xlu0 %576
        %v578 = vsel %vm536, %v575, %v577
        %v581 = vsel %vm536, %v577, %v562
        %v582 = vsel %vm557, %v497, %v578
        %v583 = vsel %vm558, %v562, %v581
        %v584 = vsub.f32 %v559, %v530
        %v585 = vsub.f32 %v560, %v531
        %v586 = vmul.f32 %v497, 2.0
        %v588 = vcombine.high %v586, %v586
        %v590 = vadd.f32 %v572, %v586
        %v591 = vadd.f32 %v573, %v588
        %v592 = vadd.f32 %v590, %v582
        %v593 = vadd.f32 %v591, %v583
        %v594 = vmul.f32 %v496, 2.0
        %v596 = vcombine.high %v594, %v594
        %v598 = vadd.f32 %v530, %v594
        %v599 = vadd.f32 %v531, %v596
        %v600 = vadd.f32 %v598, %v559
        %v601 = vadd.f32 %v599, %v560
        %v602 = vmul.f32 %v489, 16.0
        %v604 = vcombine.high %v602, %v602
        %v606 = vsub.f32 %v600, %v602
        %v607 = vsub.f32 %v601, %v604
        %v609 = vcombine.high %v489, %v489
        %v613 = vrot.slane %v584, 4
        %v614 = vrot.slane %v585, 4
        %v619 = vrot.slane %v606, 4
        %v620 = vrot.slane %v607, 4
        %v624 = vcombine.high %v493, %v493
        %vm625 = vcmask 1043456
        %v626 = vsel %vm625, %v489, %v613
        %v627 = vsel %vm625, %v609, %v614
        %v628 = vsel %vm625, %v592, %v619
        %v629 = vsel %vm625, %v593, %v620
        %v630 = vld [vmem:[%s5] sm:$0xff]
        %v631 = vld [vmem:[%s5 + $0x8] sm:$0xff]
        %v632 = vld [vmem:[%s5 + $0x10] sm:$0xff]
        %v633 = vld [vmem:[%s5 + $0x18] sm:$0xff]
        %v634 = vld [vmem:[%s6] sm:$0xff]
        %v635 = vld [vmem:[%s6 + $0x8] sm:$0xff]
        %v636 = vld [vmem:[%s6 + $0x10] sm:$0xff]
        %v637 = vld [vmem:[%s6 + $0x18] sm:$0xff]
        %639 = vset.pattern.permute.xlu0 0
        %640 = vperm.xlu0 %639, %v634
        %v641 = vpop.permute.xlu0 %640
        %644 = vset.pattern.permute.xlu0 0
        %645 = vperm.xlu0 %644, %v635
        %v646 = vpop.permute.xlu0 %645
        %649 = vset.pattern.permute.xlu0 0
        %650 = vperm.xlu0 %649, %v636
        %v651 = vpop.permute.xlu0 %650
        %654 = vset.pattern.permute.xlu0 0
        %655 = vperm.xlu0 %654, %v637
        %v656 = vpop.permute.xlu0 %655
        %vm658 = vcmask 146432
        %v660 = vsel %vm658, %v630, 0
        %v663 = vsel %vm658, %v631, 0
        %v666 = vsel %vm658, %v632, 0
        %v669 = vsel %vm658, %v633, 0
        %vm671 = vcmask 1041408
        %v672 = vsel %vm671, %v493, 0
        %v674 = vsel %vm671, %v624, 0
        %676 = vmatprep.subr.mxu0 %v627
        %677 = vmatpush1.msra.mxu0 %v626
        %678 = vmatprep.subr.mxu0 %v629
        %679 = vmatpush1.msra.mxu0 %v628
        %680 = vmatprep.subr.mxu0 %v674
        %681 = vmatpush1.msra.mxu0 %v672
        %682 = vmatprep.subr.mxu0 0.0
        %683 = vmatpush1.msra.mxu0 0.0
        %684 = vmatprep.subr.mxu0 0.0
        %685 = vmatpush1.msra.mxu0 0.0
        %686 = vmatprep.subr.mxu0 0.0
        %687 = vmatpush1.msra.mxu0 0.0
        %688 = vmatprep.subr.mxu0 0.0
        %689 = vmatpush1.msra.mxu0 0.0
        %690 = vmatprep.subr.mxu0 0.0
        %691 = vmatpush1.msra.mxu0 0.0
        %692 = vmatprep.subr.mxu0 0.0
        %693 = vmatpush1.msra.mxu0 0.0
        %694 = vmatprep.subr.mxu0 0.0
        %695 = vmatpush1.msra.mxu0 0.0
        %696 = vmatprep.subr.mxu0 0.0
        %697 = vmatpush1.msra.mxu0 0.0
        %698 = vmatprep.subr.mxu0 0.0
        %699 = vmatpush1.msra.mxu0 0.0
        %700 = vmatprep.subr.mxu0 0.0
        %701 = vmatpush1.msra.mxu0 0.0
        %702 = vmatprep.subr.mxu0 0.0
        %703 = vmatpush1.msra.mxu0 0.0
        %704 = vmatprep.subr.mxu0 0.0
        %705 = vmatpush1.msra.mxu0 0.0
        %706 = vmatprep.subr.mxu0 0.0
        %707 = vmatpush1.msra.mxu0 0.0
        %708 = vmatprep.subr.mxu0 0.0
        %709 = vmatpush1.msra.mxu0 0.0
        %710 = vmatprep.subr.mxu0 0.0
        %711 = vmatpush1.msra.mxu0 0.0
        %712 = vmatprep.subr.mxu0 0.0
        %713 = vmatpush1.msra.mxu0 0.0
        %714 = vmatprep.subr.mxu0 0.0
        %715 = vmatpush1.msra.mxu0 0.0
        %716 = vmatprep.subr.mxu0 0.0
        %717 = vmatpush1.msra.mxu0 0.0
        %718 = vmatprep.subr.mxu0 0.0
        %719 = vmatpush1.msra.mxu0 0.0
        %720 = vmatprep.subr.mxu0 0.0
        %721 = vmatpush1.msra.mxu0 0.0
        %722 = vmatprep.subr.mxu0 0.0
        %723 = vmatpush1.msra.mxu0 0.0
        %724 = vmatprep.subr.mxu0 0.0
        %725 = vmatpush1.msra.mxu0 0.0
        %726 = vmatprep.subr.mxu0 0.0
        %727 = vmatpush1.msra.mxu0 0.0
        %728 = vmatprep.subr.mxu0 0.0
        %729 = vmatpush1.msra.mxu0 0.0
        %730 = vmatprep.subr.mxu0 0.0
        %731 = vmatpush1.msra.mxu0 0.0
        %732 = vmatprep.subr.mxu0 0.0
        %733 = vmatpush1.msra.mxu0 0.0
        %734 = vmatprep.subr.mxu0 0.0
        %735 = vmatpush1.msra.mxu0 0.0
        %736 = vmatprep.subr.mxu0 0.0
        %737 = vmatpush1.msra.mxu0 0.0
        %738 = vmatprep.subr.mxu0 0.0
        %739 = vmatpush1.msra.mxu0 0.0
        %740 = vmatprep.mubr.f32.mxu0 0.0
        %741 = vmatmul.mubr.f32.gmra.mrb[0].mxu0 %v660
        %v742 = vpop.f32.mrb[0].mxu0
        %v743 = vadd.f32 %v641, %v742
        %v744 = vpop.f32.mrb[0].mxu0
        %v745 = vadd.f32 %v641, %v744
        %746 = vmatprep.mubr.f32.mxu0 0.0
        %747 = vmatmul.mubr.f32.gmra.mrb[0].mxu0 %v663
        %v748 = vpop.f32.mrb[0].mxu0
        %v749 = vadd.f32 %v646, %v748
        %v750 = vpop.f32.mrb[0].mxu0
        %v751 = vadd.f32 %v646, %v750
        %752 = vmatprep.mubr.f32.mxu0 0.0
        %753 = vmatmul.mubr.f32.gmra.mrb[0].mxu0 %v666
        %v754 = vpop.f32.mrb[0].mxu0
        %v755 = vadd.f32 %v651, %v754
        %v756 = vpop.f32.mrb[0].mxu0
        %v757 = vadd.f32 %v651, %v756
        %758 = vmatprep.mubr.f32.mxu0 0.0
        %759 = vmatmul.mubr.f32.gmra.mrb[0].mxu0 %v669
        %v760 = vpop.f32.mrb[0].mxu0
        %v761 = vadd.f32 %v656, %v760
        %v762 = vpop.f32.mrb[0].mxu0
        %v763 = vadd.f32 %v656, %v762
        %764 = vdwg.mxu0
        %v765 = vmax.f32 %v743, 0.0
        %v766 = vmax.f32 %v745, 0.0
        %v767 = vmax.f32 %v749, 0.0
        %v768 = vmax.f32 %v751, 0.0
        %v769 = vmax.f32 %v755, 0.0
        %v770 = vmax.f32 %v757, 0.0
        %v771 = vmax.f32 %v761, 0.0
        %v772 = vmax.f32 %v763, 0.0
        %v773 = vld [vmem:[%s7] sm:$0xf]
        %v774 = vld [vmem:[%s8] sm:$0xf]
        %776 = vset.pattern.permute.xlu0 0
        %777 = vperm.xlu0 %776, %v774
        %v778 = vpop.permute.xlu0 %777
        %vm780 = vcmask 261120
        %v782 = vsel %vm780, %v773, 0
        %784 = vmatprep.subr.mxu0 %v766
        %785 = vmatpush1.msra.mxu0 %v765
        %786 = vmatprep.subr.mxu0 %v768
        %787 = vmatpush1.msra.mxu0 %v767
        %788 = vmatprep.subr.mxu0 %v770
        %789 = vmatpush1.msra.mxu0 %v769
        %790 = vmatprep.subr.mxu0 %v772
        %791 = vmatpush1.msra.mxu0 %v771
        %792 = vmatprep.subr.mxu0 0.0
        %793 = vmatpush1.msra.mxu0 0.0
        %794 = vmatprep.subr.mxu0 0.0
        %795 = vmatpush1.msra.mxu0 0.0
        %796 = vmatprep.subr.mxu0 0.0
        %797 = vmatpush1.msra.mxu0 0.0
        %798 = vmatprep.subr.mxu0 0.0
        %799 = vmatpush1.msra.mxu0 0.0
        %800 = vmatprep.subr.mxu0 0.0
        %801 = vmatpush1.msra.mxu0 0.0
        %802 = vmatprep.subr.mxu0 0.0
        %803 = vmatpush1.msra.mxu0 0.0
        %804 = vmatprep.subr.mxu0 0.0
        %805 = vmatpush1.msra.mxu0 0.0
        %806 = vmatprep.subr.mxu0 0.0
        %807 = vmatpush1.msra.mxu0 0.0
        %808 = vmatprep.subr.mxu0 0.0
        %809 = vmatpush1.msra.mxu0 0.0
        %810 = vmatprep.subr.mxu0 0.0
        %811 = vmatpush1.msra.mxu0 0.0
        %812 = vmatprep.subr.mxu0 0.0
        %813 = vmatpush1.msra.mxu0 0.0
        %814 = vmatprep.subr.mxu0 0.0
        %815 = vmatpush1.msra.mxu0 0.0
        %816 = vmatprep.subr.mxu0 0.0
        %817 = vmatpush1.msra.mxu0 0.0
        %818 = vmatprep.subr.mxu0 0.0
        %819 = vmatpush1.msra.mxu0 0.0
        %820 = vmatprep.subr.mxu0 0.0
        %821 = vmatpush1.msra.mxu0 0.0
        %822 = vmatprep.subr.mxu0 0.0
        %823 = vmatpush1.msra.mxu0 0.0
        %824 = vmatprep.subr.mxu0 0.0
        %825 = vmatpush1.msra.mxu0 0.0
        %826 = vmatprep.subr.mxu0 0.0
        %827 = vmatpush1.msra.mxu0 0.0
        %828 = vmatprep.subr.mxu0 0.0
        %829 = vmatpush1.msra.mxu0 0.0
        %830 = vmatprep.subr.mxu0 0.0
        %831 = vmatpush1.msra.mxu0 0.0
        %832 = vmatprep.subr.mxu0 0.0
        %833 = vmatpush1.msra.mxu0 0.0
        %834 = vmatprep.subr.mxu0 0.0
        %835 = vmatpush1.msra.mxu0 0.0
        %836 = vmatprep.subr.mxu0 0.0
        %837 = vmatpush1.msra.mxu0 0.0
        %838 = vmatprep.subr.mxu0 0.0
        %839 = vmatpush1.msra.mxu0 0.0
        %840 = vmatprep.subr.mxu0 0.0
        %841 = vmatpush1.msra.mxu0 0.0
        %842 = vmatprep.subr.mxu0 0.0
        %843 = vmatpush1.msra.mxu0 0.0
        %844 = vmatprep.subr.mxu0 0.0
        %845 = vmatpush1.msra.mxu0 0.0
        %846 = vmatprep.subr.mxu0 0.0
        %847 = vmatpush1.msra.mxu0 0.0
        %848 = vmatprep.mubr.f32.mxu0 0.0
        %849 = vmatmul.mubr.f32.gmra.mrb[0].mxu0 %v782
        %v850 = vpop.f32.mrb[0].mxu0
        %v851 = vadd.f32 %v778, %v850
        %v852 = vpop.f32.mrb[0].mxu0
        %v853 = vadd.f32 %v778, %v852
        %854 = vdwg.mxu0
        %v856 = vlaneseq
        %v857 = vshrl.u32 %v856, 7
        %v858 = vsub.s32 0, %v857
        %v859 = vrot.slane %v492, %v858
        %v860 = vlaneseq
        %v861 = vshrl.u32 %v860, 7
        %v862 = vsub.s32 1, %v861
        %v863 = vrot.slane %v492, %v862
        %v866 = vmul.f32 %v851, %v859
        %v867 = vmul.f32 %v853, %v863
        %v870 = vcombine.low %v866, %v867
        %v872 = vadd.f32 %v489, %v870
        %873 = vst [vmem:[%s442] sm:$0xff] %v872
        %s874 = sand.u32 %s267, 1
        %s875 = scalar_lea.sflag [#allocation3], %s874
        %s876 = sand.u32 %s267, 1
        %s877 = smul.addr %s876, 8
        %s878 = scalar_lea.vmem [#allocation2], %s877
        // Predicated region
        $region57: #{tpu_custom_call.1} parent=55 // pred_check
          %p879 = pneg %p277
        $region58: #{tpu_custom_call.1} parent=55 // pred_check_branch
          %881 = sbr.rel (%p879) target = $region60
        $region59: #{tpu_custom_call.1} parent=55 // pred_region
          %s882 = smul.u32 2, %s28
          %s884 = ssub.s32 128, 128
          %885 = vsyncadd %s875, %s884
          %s886 = smul.addr %s27, 2
          %s887 = sadd.s32 %s882, %s886
          %s888 = smul.addr %s887, 64
          %s889 = scalar_lea.hbm %s9, %s888
          %s891 = sshll.u32 %s878, 4
          %s892 = int_to_ptr.vmem [resolvable:$true] %s891
          %894 = dma.vmem_to_hbm [thread:$0]  %s892, 128, %s889, %s875
        $region60: #{tpu_custom_call.1} parent=55 // pred_fallthru
          _
      $region56: #{tpu_custom_call.1} parent=5 // pred_fallthru
        _
      %p895 = scmp.le.s32.totalorder 2, %s18
      // Predicated region
      $region61: #{tpu_custom_call.1} parent=5 // pred_check
        %p896 = pneg %p895
      $region62: #{tpu_custom_call.1} parent=5 // pred_check_branch
        %898 = sbr.rel (%p896) target = $region64
      $region63: #{tpu_custom_call.1} parent=5 // pred_region
        %s899 = ssub.s32 %s18, 2
        // Predicated region
        $region65: #{tpu_custom_call.1} parent=63 // pred_check
          %p900 = pneg %p283
        $region66: #{tpu_custom_call.1} parent=63 // pred_check_branch
          %902 = sbr.rel (%p900) target = $region68
        $region67: #{tpu_custom_call.1} parent=63 // pred_region
          %s903 = sand.u32 %s268, 1
          %s904 = scalar_lea.sflag [#allocation3], %s903
          %s905 = sand.u32 %s268, 1
          %s906 = smul.addr %s905, 8
          %s907 = scalar_lea.vmem [#allocation2], %s906
          %908 = dma.done %s904, 128
        $region68: #{tpu_custom_call.1} parent=63 // pred_fallthru
          _
      $region64: #{tpu_custom_call.1} parent=5 // pred_fallthru
        _
    $region6: #{tpu_custom_call.1} parent=1 // loop_footer
      %s22 = sadd.s32 1, %s18
    $region7: #{tpu_custom_call.1} parent=1 // loop_footer_branch
      %17 = sbr.rel target = $region3
    $region8: #{tpu_custom_call.1} parent=1 // loop_exit
      _
    %909 = vsyncpa [#allocation3], 1
    %s910 = scalar_lea.sflag [#allocation3], 1
    %911 = vsyncpa %s910, 1

</llo_original>
